<compile_context>
chip_gen: v7x
topology: tpu7x:2x2x1
jax: 0.10.0
libtpu: 0.0.40
codegen_flags: <defaults>
</compile_context>

<pallas_src>
import jax
import jax.numpy as jnp
from jax.experimental import pallas as pl
from jax.experimental.pallas import tpu as pltpu

_LANES = 384            # lcm(3, 128): 128 hkl triplets per lane-dense row
_TR_MAX = 1024          # rows of width 384 per grid step (1.5 MiB f32 / buffer)
_MIN_KERNEL_ROWS = 512  # below this, plain XLA is strictly faster


def _round_up(x, m):
    return ((x + m - 1) // m) * m


def _num_tensorcores():
    """Best-effort TensorCores-per-chip query (v5e/v6e: 1, v7x: 2)."""
    try:
        info = pltpu.get_tpu_info()
    except Exception:
        return 2  # unknown -> conservatively allow multi-core sharding
    for name in ("num_cores", "core_count", "num_tensorcores",
                 "tensorcore_count", "cores_per_chip"):
        val = getattr(info, name, None)
        if isinstance(val, int) and val > 0:
            return val
    return 2


def _make_lane_coeffs(rot_f32):
    """Build 5 lane-periodic coefficient rows (shape (5, 384)).

    In the lane-dense layout, lane p holds component c = p % 3 of triplet
    p // 3.  The matmul out[p] = sum_i x[p + (i - c)] * rot[i, c] becomes a
    sum over lane shifts s = i - c in {-2..+2} with coefficient
    coeff_s[p] = rot[c + s, c] when 0 <= c + s <= 2 else 0.
    Row order: [s=-2, s=-1, s=0, s=+1, s=+2].
    """
    r = rot_f32
    z = jnp.zeros((), jnp.float32)
    patterns = jnp.stack([
        jnp.stack([z,       z,       r[0, 2]]),   # s = -2
        jnp.stack([z,       r[0, 1], r[1, 2]]),   # s = -1
        jnp.stack([r[0, 0], r[1, 1], r[2, 2]]),   # s =  0
        jnp.stack([r[1, 0], r[2, 1], z      ]),   # s = +1
        jnp.stack([r[2, 0], z,       z      ]),   # s = +2
    ])                                             # (5, 3)
    return jnp.tile(patterns, (1, _LANES // 3))    # (5, 384), period-3 lanes


def _op_kernel(x_ref, c_ref, den_ref, out_ref):
    # x_ref  : (TR, 384) lane-dense tile; each row packs 128 triplets
    #          [h0,k0,l0, h1,k1,l1, ...] in the original integer dtype.
    # c_ref  : (5, 384) f32 lane-periodic coefficients (rows: s=-2..+2).
    # den_ref: (1,) f32 scalar in SMEM.
    # out_ref: (TR, 384) tile in the original hkl dtype.
    x = x_ref[...].astype(jnp.float32)     # in-kernel cast (VPU)
    den = den_ref[0]

    # out[p] = sum_s x[p + s] * coeff_s[p].  Rolls land on the XLU slot, the
    # multiply-adds on the VPU; lane wrap-around hits zero coefficients only.
    y = x * c_ref[2:3, :]                                        # s =  0
    y = y + pltpu.roll(x, shift=1, axis=1) * c_ref[1:2, :]       # s = -1
    y = y + pltpu.roll(x, shift=2, axis=1) * c_ref[0:1, :]       # s = -2
    y = y + pltpu.roll(x, shift=_LANES - 1, axis=1) * c_ref[3:4, :]  # s = +1
    y = y + pltpu.roll(x, shift=_LANES - 2, axis=1) * c_ref[4:5, :]  # s = +2

    # Exact divide then floor (matches torch.floor_divide on floats).  The
    # single EUP divide per vreg stays under the HBM roofline, so we keep the
    # exact form instead of a reciprocal multiply (1/24 is inexact in f32).
    out_ref[...] = jnp.floor(y / den).astype(out_ref.dtype)


def _op_reference(hkl, rot, den):
    """Plain-JAX fallback / reference with identical semantics."""
    y = hkl.astype(jnp.float32) @ jnp.asarray(rot, jnp.float32)
    return jnp.floor(y / jnp.asarray(den, jnp.float32)).astype(hkl.dtype)


def _choose_row_tile(n_rows, n_cores):
    """Rows (of width 384) per grid step."""
    tr = n_rows
    if n_cores > 1 and n_rows >= 16:
        # Split so each TensorCore gets work (v7x); keep multiples of 8.
        tr = _round_up(pl.cdiv(n_rows, n_cores), 8)
    tr = min(tr, _TR_MAX)
    if tr >= n_rows:
        return n_rows          # single full-extent block
    return tr                  # multiple of 8 by construction


def op_apply(hkl, rot, den, identity=False):
    """Apply the symmetry op to hkl of shape (N, 3). Returns same dtype as hkl."""
    if identity:
        return hkl

    n, k = hkl.shape
    assert k == 3, "hkl must be (N, 3)"

    rot_f32 = jnp.asarray(rot, jnp.float32)
    if n < _MIN_KERNEL_ROWS:
        # Launch overhead dwarfs the work at tiny N.
        return _op_reference(hkl, rot_f32, den)

    # Lane-dense view: (N, 3) -> (N/128, 384).  Zero-copy when N % 128 == 0.
    # TODO(synk): a truly zero-copy ragged path (N % 128 != 0) would need a
    # manual-DMA tail kernel; here we pad rows to a multiple of 128 instead.
    pad = (-n) % 128
    hkl_in = hkl if pad == 0 else jnp.pad(hkl, ((0, pad), (0, 0)))
    n_rows = (n + pad) // 128
    x2 = hkl_in.reshape(n_rows, _LANES)

    coeffs = _make_lane_coeffs(rot_f32)                       # (5, 384) f32
    den_arr = jnp.asarray(den, jnp.float32).reshape((1,))     # SMEM scalar

    tr = _choose_row_tile(n_rows, _num_tensorcores())
    grid = (pl.cdiv(n_rows, tr),)   # ragged tail handled by boundary masking

    out = pl.pallas_call(
        _op_kernel,
        out_shape=jax.ShapeDtypeStruct((n_rows, _LANES), hkl.dtype),
        grid=grid,
        in_specs=[
            pl.BlockSpec((tr, _LANES), lambda i: (i, 0)),   # lane-dense tile
            pl.BlockSpec((5, _LANES), lambda i: (0, 0)),    # coeffs, resident
            pl.BlockSpec(memory_space=pltpu.SMEM),          # den scalar
        ],
        out_specs=pl.BlockSpec((tr, _LANES), lambda i: (i, 0)),
        compiler_params=pltpu.CompilerParams(
            dimension_semantics=("parallel",)),
    )(x2, coeffs, den_arr)

    out = out.reshape(n_rows * 128, 3)      # zero-copy view back to (N_pad, 3)
    return out if pad == 0 else out[:n]


if __name__ == "__main__":
    key = jax.random.PRNGKey(0)

    # Deterministic "gemmi op" parameters (a 3-fold rotation), DEN = 24.
    rot = jnp.array([[0, -1, 0],
                     [1, -1, 0],
                     [0,  0, 1]], dtype=jnp.float32) * 24.0
    den = 24.0

    # Case 1: N % 128 == 0 -> fully zero-copy lane-dense kernel path.
    hkl = jax.random.randint(key, (4096, 3), minval=-64, maxval=65, dtype=jnp.int32)
    out = jax.block_until_ready(op_apply(hkl, rot, den, identity=False))
    ref = _op_reference(hkl, rot, den)
    assert out.shape == hkl.shape and out.dtype == hkl.dtype
    assert bool(jnp.all(out == ref))

    # Case 2: ragged N -> exercises the row-padding + boundary handling path.
    hkl2 = jax.random.randint(jax.random.PRNGKey(1), (1000, 3),
                              minval=-64, maxval=65, dtype=jnp.int32)
    out2 = jax.block_until_ready(op_apply(hkl2, rot, den, identity=False))
    ref2 = _op_reference(hkl2, rot, den)
    assert out2.shape == hkl2.shape and out2.dtype == hkl2.dtype
    assert bool(jnp.all(out2 == ref2))

    # Case 3: tiny N -> plain-XLA fallback path.
    hkl3 = jax.random.randint(jax.random.PRNGKey(2), (100, 3),
                              minval=-64, maxval=65, dtype=jnp.int32)
    out3 = jax.block_until_ready(op_apply(hkl3, rot, den, identity=False))
    assert bool(jnp.all(out3 == _op_reference(hkl3, rot, den)))

    # Case 4: identity op returns the input unchanged.
    out4 = op_apply(hkl2, rot, den, identity=True)
    assert bool(jnp.all(out4 == hkl2))

    print("KERNEL_OK")
</pallas_src>

<mosaic_0001>
module attributes {stable_mosaic.version = 11 : i64} {
  func.func @_op_kernel(%arg0: i32, %arg1: memref<16x384xi32, #tpu.memory_space<vmem>>, %arg2: memref<5x384xf32, #tpu.memory_space<vmem>>, %arg3: memref<1xf32, #tpu.memory_space<smem>>, %arg4: memref<16x384xi32, #tpu.memory_space<vmem>>) attributes {dimension_semantics = [#tpu.dimension_semantics<parallel>], iteration_bounds = array<i64: 2>, scalar_prefetch = 0 : i64, scratch_operands = 0 : i64, tpu.core_type = #tpu.core_type<tc>, window_params = [{transform_indices = @transform_0, window_bounds = array<i64: 16, 384>}, {pipeline_mode = #tpu.pipeline_mode<synchronous>, transform_indices = @transform_1, window_bounds = array<i64: 5, 384>}, {transform_indices = @transform_2, window_bounds = array<i64: 1>}, {transform_indices = @transform_3, window_bounds = array<i64: 16, 384>}]} {
    %c0 = arith.constant 0 : index
    %c0_0 = arith.constant 0 : index
    %0 = vector.load %arg1[%c0, %c0_0] : memref<16x384xi32, #tpu.memory_space<vmem>>, vector<16x384xi32>
    %1 = arith.sitofp %0 : vector<16x384xi32> to vector<16x384xf32>
    %c0_1 = arith.constant 0 : index
    %2 = memref.load %arg3[%c0_1] : memref<1xf32, #tpu.memory_space<smem>>
    %c2 = arith.constant 2 : index
    %c0_2 = arith.constant 0 : index
    %3 = vector.load %arg2[%c2, %c0_2] : memref<5x384xf32, #tpu.memory_space<vmem>>, vector<1x384xf32>
    %4 = vector.broadcast %3 : vector<1x384xf32> to vector<16x384xf32>
    %5 = arith.mulf %1, %4 : vector<16x384xf32>
    %c1_i32 = arith.constant 1 : i32
    %6 = tpu.dynamic_rotate %1 by %c1_i32 dim 1 : vector<16x384xf32>, i32 -> vector<16x384xf32>
    %c1 = arith.constant 1 : index
    %c0_3 = arith.constant 0 : index
    %7 = vector.load %arg2[%c1, %c0_3] : memref<5x384xf32, #tpu.memory_space<vmem>>, vector<1x384xf32>
    %8 = vector.broadcast %7 : vector<1x384xf32> to vector<16x384xf32>
    %9 = arith.mulf %6, %8 : vector<16x384xf32>
    %10 = arith.addf %5, %9 : vector<16x384xf32>
    %c2_i32 = arith.constant 2 : i32
    %11 = tpu.dynamic_rotate %1 by %c2_i32 dim 1 : vector<16x384xf32>, i32 -> vector<16x384xf32>
    %c0_4 = arith.constant 0 : index
    %c0_5 = arith.constant 0 : index
    %12 = vector.load %arg2[%c0_4, %c0_5] : memref<5x384xf32, #tpu.memory_space<vmem>>, vector<1x384xf32>
    %13 = vector.broadcast %12 : vector<1x384xf32> to vector<16x384xf32>
    %14 = arith.mulf %11, %13 : vector<16x384xf32>
    %15 = arith.addf %10, %14 : vector<16x384xf32>
    %c383_i32 = arith.constant 383 : i32
    %16 = tpu.dynamic_rotate %1 by %c383_i32 dim 1 : vector<16x384xf32>, i32 -> vector<16x384xf32>
    %c3 = arith.constant 3 : index
    %c0_6 = arith.constant 0 : index
    %17 = vector.load %arg2[%c3, %c0_6] : memref<5x384xf32, #tpu.memory_space<vmem>>, vector<1x384xf32>
    %18 = vector.broadcast %17 : vector<1x384xf32> to vector<16x384xf32>
    %19 = arith.mulf %16, %18 : vector<16x384xf32>
    %20 = arith.addf %15, %19 : vector<16x384xf32>
    %c382_i32 = arith.constant 382 : i32
    %21 = tpu.dynamic_rotate %1 by %c382_i32 dim 1 : vector<16x384xf32>, i32 -> vector<16x384xf32>
    %c4 = arith.constant 4 : index
    %c0_7 = arith.constant 0 : index
    %22 = vector.load %arg2[%c4, %c0_7] : memref<5x384xf32, #tpu.memory_space<vmem>>, vector<1x384xf32>
    %23 = vector.broadcast %22 : vector<1x384xf32> to vector<16x384xf32>
    %24 = arith.mulf %21, %23 : vector<16x384xf32>
    %25 = arith.addf %20, %24 : vector<16x384xf32>
    %26 = vector.broadcast %2 : f32 to vector<16x384xf32>
    %27 = arith.divf %25, %26 : vector<16x384xf32>
    %28 = math.floor %27 : vector<16x384xf32>
    %29 = arith.fptosi %28 : vector<16x384xf32> to vector<16x384xi32>
    %c0_8 = arith.constant 0 : index
    %c0_9 = arith.constant 0 : index
    %30 = vector.load %arg4[%c0_8, %c0_9] : memref<16x384xi32, #tpu.memory_space<vmem>>, vector<16x384xi32>
    tpu.vector_store %arg4[%c0_8, %c0_9], %29 {strides = array<i32>} : memref<16x384xi32, #tpu.memory_space<vmem>>, vector<16x384xi32>,
    return
  }
  func.func @transform_0(%arg0: i32) -> (i32, i32) {
    %c0_i32 = arith.constant 0 : i32
    %c0_i32_0 = arith.constant 0 : i32
    return %arg0, %c0_i32 : i32, i32
  }
  func.func @transform_1(%arg0: i32) -> (i32, i32) {
    %c0_i32 = arith.constant 0 : i32
    %c0_i32_0 = arith.constant 0 : i32
    %c0_i32_1 = arith.constant 0 : i32
    return %c0_i32, %c0_i32_0 : i32, i32
  }
  func.func @transform_2(%arg0: i32) -> i32 {
    %c0_i32 = arith.constant 0 : i32
    %c0_i32_0 = arith.constant 0 : i32
    return %c0_i32 : i32
  }
  func.func @transform_3(%arg0: i32) -> (i32, i32) {
    %c0_i32 = arith.constant 0 : i32
    %c0_i32_0 = arith.constant 0 : i32
    return %arg0, %c0_i32 : i32, i32
  }
}

</mosaic_0001>

<llo_original>
// kernel: tpu_custom_call.1
$region0: #{tpu_custom_call.1}
  #allocation0 [shape = 'u32[]', space=smem, size = 0x4, offset = 0x4, fixed_abs, tag = 'smem constant byte address 0x4 - core index']
  #allocation1 [shape = 'u32[144,128]{1,0:T(1,128)}', space=vmem, size = 0x12000, scoped, tag = 'internal scratch']
  #allocation2 [shape = 'f32[1]{0:T(128)S(6)}', space=smem, size = 0x200, scoped, tag = 'scoped memory for tpu_custom_call.1']
  %s0 = inlined_call_operand.hbm [shape: s32[32,384], index: 0, kind: input, shape index: {}]
  %s1 = inlined_call_operand.hbm [shape: f32[5,384], index: 1, kind: input, shape index: {}]
  %s2 = inlined_call_operand.<no memory space> [shape: f32[1], index: 2, kind: input, shape index: {}]
  %s3 = inlined_call_operand.hbm [shape: s32[32,384], index: 3, kind: output, shape index: {}]
  %s4 = sld [smem:[#allocation0]]
  $region53: #{tpu_custom_call.1} parent=0
    _
  %s6 = ssub.s32 1, %s4
  %s7 = scalar_select 0, %s6, %s4
  %8 = sst [smem:[#allocation2]] %s2
  $region1: #{tpu_custom_call.1} parent=0
    #allocation3 [shape = 'u8[49152]{0}', space=vmem, size = 0xc000, scoped, tag = 'input window, operand 0']
    #allocation4 [shape = 's32[2]{0}', space=sflag, size = 0x8, scoped, tag = 'scoped memory for tpu_custom_call.1']
    #allocation5 [shape = 's32[2]{0}', space=sflag, size = 0x8, scoped, tag = 'scoped memory for tpu_custom_call.1']
    #allocation6 [shape = 'u8[12288]{0}', space=vmem, size = 0x3000, scoped, tag = 'input window, operand 1, single buffered']
    #allocation7 [shape = 's32[1]{0}', space=sflag, size = 0x4, scoped, tag = 'scoped memory for tpu_custom_call.1']
    #allocation8 [shape = 'u8[49152]{0}', space=vmem, size = 0xc000, scoped, tag = 'output window, operand 0']
    %9 = vsyncpa [#allocation4], 0
    %s10 = scalar_lea.sflag [#allocation4], 1
    %11 = vsyncpa %s10, 0
    %12 = vsyncpa [#allocation7], 0
    %13 = vsyncpa [#allocation5], 0
    %s14 = scalar_lea.sflag [#allocation5], 1
    %15 = vsyncpa %s14, 0
    loop: start=0, step=1, limit=4
    $region2: #{tpu_custom_call.1} parent=1 // loop_pre_header
      _
    $region3: #{tpu_custom_call.1} parent=1 // loop_header
      %s17 = sphi 0, %s21
      %p18 = scmp.ge.s32.totalorder %s17, 4
      %s27 = sphi 0, %s29
      %s30 = sphi 0, %s27
      %s31 = sphi 0, %s30
      %s47 = sphi 0, %s31
      %s51 = sphi 0, %s51
      %s53 = sphi 0, %s51
      %s54 = sphi 0, %s53
      %s68 = sphi 0, %s54
      %s72 = sphi 0, %s72
      %s74 = sphi 0, %s72
      %s75 = sphi 0, %s74
      %s89 = sphi 0, %s75
      %s95 = sphi 0, %s97
      %s98 = sphi 0, %s95
      %s99 = sphi 0, %s98
      %s115 = sphi 0, %s99
    $region4: #{tpu_custom_call.1} parent=1 // loop_header_branch
      %20 = sbr.rel (%p18) target = $region8
    $region5: #{tpu_custom_call.1} parent=1 // loop_body
      %s22 = ssub.s32 %s17, 1
      %s23 = ssub.s32 %s17, 2
      %s24 = sadd.s32 %s17, 1
      %s25 = ssub.s32 %s17, %s24
      %p26 = scmp.eq.s32.totalorder %s25, 0
      %s28 = sadd.s32 %s27, 1
      %s29 = scalar_select %p26, %s27, %s28
      %p32 = pneg %p26
      %p33 = scmp.eq.s32.totalorder %s17, 1
      %p34 = por %p32, %p33
      %p35 = scmp.ne.s32.totalorder %s27, %s30
      %p36 = scmp.eq.s32.totalorder %s17, 0
      %p37 = por %p35, %p36
      %p38 = scmp.ne.s32.totalorder %s27, %s30
      %p39 = scmp.eq.s32.totalorder %s22, 1
      %p40 = por %p38, %p39
      %p41 = scmp.ne.s32.totalorder %s30, %s31
      %p42 = scmp.eq.s32.totalorder %s22, 0
      %p43 = por %p41, %p42
      %p44 = scmp.ne.s32.totalorder %s30, %s31
      %p45 = scmp.eq.s32.totalorder %s23, 1
      %p46 = por %p44, %p45
      %p48 = scmp.ne.s32.totalorder %s31, %s47
      %p49 = scmp.eq.s32.totalorder %s23, 0
      %p50 = por %p48, %p49
      %s52 = sadd.s32 %s51, 1
      %p55 = scmp.eq.s32.totalorder %s17, 1
      %p56 = scmp.ne.s32.totalorder %s51, %s53
      %p57 = scmp.eq.s32.totalorder %s17, 0
      %p58 = por %p56, %p57
      %p59 = scmp.ne.s32.totalorder %s51, %s53
      %p60 = scmp.eq.s32.totalorder %s22, 1
      %p61 = por %p59, %p60
      %p62 = scmp.ne.s32.totalorder %s53, %s54
      %p63 = scmp.eq.s32.totalorder %s22, 0
      %p64 = por %p62, %p63
      %p65 = scmp.ne.s32.totalorder %s53, %s54
      %p66 = scmp.eq.s32.totalorder %s23, 1
      %p67 = por %p65, %p66
      %p69 = scmp.ne.s32.totalorder %s54, %s68
      %p70 = scmp.eq.s32.totalorder %s23, 0
      %p71 = por %p69, %p70
      %s73 = sadd.s32 %s72, 1
      %p76 = scmp.eq.s32.totalorder %s17, 1
      %p77 = scmp.ne.s32.totalorder %s72, %s74
      %p78 = scmp.eq.s32.totalorder %s17, 0
      %p79 = por %p77, %p78
      %p80 = scmp.ne.s32.totalorder %s72, %s74
      %p81 = scmp.eq.s32.totalorder %s22, 1
      %p82 = por %p80, %p81
      %p83 = scmp.ne.s32.totalorder %s74, %s75
      %p84 = scmp.eq.s32.totalorder %s22, 0
      %p85 = por %p83, %p84
      %p86 = scmp.ne.s32.totalorder %s74, %s75
      %p87 = scmp.eq.s32.totalorder %s23, 1
      %p88 = por %p86, %p87
      %p90 = scmp.ne.s32.totalorder %s75, %s89
      %p91 = scmp.eq.s32.totalorder %s23, 0
      %p92 = por %p90, %p91
      %s93 = ssub.s32 %s17, %s24
      %p94 = scmp.eq.s32.totalorder %s93, 0
      %s96 = sadd.s32 %s95, 1
      %s97 = scalar_select %p94, %s95, %s96
      %p100 = pneg %p94
      %p101 = scmp.eq.s32.totalorder %s17, 1
      %p102 = por %p100, %p101
      %p103 = scmp.ne.s32.totalorder %s95, %s98
      %p104 = scmp.eq.s32.totalorder %s17, 0
      %p105 = por %p103, %p104
      %p106 = scmp.ne.s32.totalorder %s95, %s98
      %p107 = scmp.eq.s32.totalorder %s22, 1
      %p108 = por %p106, %p107
      %p109 = scmp.ne.s32.totalorder %s98, %s99
      %p110 = scmp.eq.s32.totalorder %s22, 0
      %p111 = por %p109, %p110
      %p112 = scmp.ne.s32.totalorder %s98, %s99
      %p113 = scmp.eq.s32.totalorder %s23, 1
      %p114 = por %p112, %p113
      %p116 = scmp.ne.s32.totalorder %s99, %s115
      %p117 = scmp.eq.s32.totalorder %s23, 0
      %p118 = por %p116, %p117
      %p119 = scmp.le.s32.totalorder 1, %s17
      %p120 = scmp.lt.s32.totalorder %s17, 3
      %p121 = pnand %p119, %p120
      %p122 = pneg %p121
      // Predicated region
      $region9: #{tpu_custom_call.1} parent=5 // pred_check
        _
      $region10: #{tpu_custom_call.1} parent=5 // pred_check_branch
        %124 = sbr.rel (%p121) target = $region12
      $region11: #{tpu_custom_call.1} parent=5 // pred_region
        %s125 = ssub.s32 %s17, 1
        // Predicated region
        $region13: #{tpu_custom_call.1} parent=11 // pred_check
          %p126 = pneg %p64
        $region14: #{tpu_custom_call.1} parent=11 // pred_check_branch
          %128 = sbr.rel (%p126) target = $region16
        $region15: #{tpu_custom_call.1} parent=11 // pred_region
          %s130 = ssub.s32 384, 384
          %131 = vsyncadd [#allocation7], %s130
          %s133 = sshll.u32 [#allocation6], 4
          %s134 = int_to_ptr.vmem [resolvable:$true] %s133
          %136 = dma.hbm_to_vmem [thread:$0]  %s1, 384, %s134, [#allocation7]
        $region16: #{tpu_custom_call.1} parent=11 // pred_fallthru
          _
        // Predicated region
        $region17: #{tpu_custom_call.1} parent=11 // pred_check
          %p137 = pneg %p85
        $region18: #{tpu_custom_call.1} parent=11 // pred_check_branch
          %139 = sbr.rel (%p137) target = $region20
        $region19: #{tpu_custom_call.1} parent=11 // pred_region
          _
        $region20: #{tpu_custom_call.1} parent=11 // pred_fallthru
          _
      $region12: #{tpu_custom_call.1} parent=5 // pred_fallthru
        _
      %p140 = scmp.lt.s32.totalorder %s17, 2
      // Predicated region
      $region21: #{tpu_custom_call.1} parent=5 // pred_check
        %p141 = pneg %p140
      $region22: #{tpu_custom_call.1} parent=5 // pred_check_branch
        %143 = sbr.rel (%p141) target = $region24
      $region23: #{tpu_custom_call.1} parent=5 // pred_region
        // Predicated region
        $region25: #{tpu_custom_call.1} parent=23 // pred_check
          %p144 = pneg %p37
        $region26: #{tpu_custom_call.1} parent=23 // pred_check_branch
          %146 = sbr.rel (%p144) target = $region28
        $region27: #{tpu_custom_call.1} parent=23 // pred_region
          %s147 = sand.u32 %s27, 1
          %s148 = scalar_lea.sflag [#allocation4], %s147
          %s149 = sand.u32 %s27, 1
          %s150 = smul.addr %s149, 48
          %s151 = scalar_lea.vmem [#allocation3], %s150
          %s152 = smul.u32 2, %s17
          %s154 = ssub.s32 768, 768
          %155 = vsyncadd %s148, %s154
          %s156 = smul.addr %s152, 3
          %s157 = smul.addr %s156, 128
          %s158 = scalar_lea.hbm %s0, %s157
          %s159 = sshll.u32 %s151, 4
          %s160 = int_to_ptr.vmem [resolvable:$true] %s159
          %165 = dma.hbm_to_vmem [thread:$0]  %s158, 768, %s160, %s148, 384, 384, 24
        $region28: #{tpu_custom_call.1} parent=23 // pred_fallthru
          _
      $region24: #{tpu_custom_call.1} parent=5 // pred_fallthru
        _
      %p166 = scmp.le.s32.totalorder 1, %s17
      %p167 = scmp.lt.s32.totalorder %s17, 3
      %p168 = pnand %p166, %p167
      %p169 = pneg %p168
      // Predicated region
      $region29: #{tpu_custom_call.1} parent=5 // pred_check
        _
      $region30: #{tpu_custom_call.1} parent=5 // pred_check_branch
        %171 = sbr.rel (%p168) target = $region32
      $region31: #{tpu_custom_call.1} parent=5 // pred_region
        %s172 = ssub.s32 %s17, 1
        %s173 = sand.u32 %s30, 1
        %s174 = scalar_lea.sflag [#allocation4], %s173
        %s175 = sand.u32 %s30, 1
        %s176 = smul.addr %s175, 48
        %s177 = scalar_lea.vmem [#allocation3], %s176
        // Predicated region
        $region33: #{tpu_custom_call.1} parent=31 // pred_check
          %p178 = pneg %p43
        $region34: #{tpu_custom_call.1} parent=31 // pred_check_branch
          %180 = sbr.rel (%p178) target = $region36
        $region35: #{tpu_custom_call.1} parent=31 // pred_region
          %181 = dma.done %s174, 768
        $region36: #{tpu_custom_call.1} parent=31 // pred_fallthru
          _
        // Predicated region
        $region37: #{tpu_custom_call.1} parent=31 // pred_check
          %p182 = pneg %p64
        $region38: #{tpu_custom_call.1} parent=31 // pred_check_branch
          %184 = sbr.rel (%p182) target = $region40
        $region39: #{tpu_custom_call.1} parent=31 // pred_region
          %185 = dma.done [#allocation7], 384
        $region40: #{tpu_custom_call.1} parent=31 // pred_fallthru
          _
        %s186 = sand.u32 %s30, 1
        %s187 = scalar_lea.sflag [#allocation4], %s186
        %s188 = sand.u32 %s30, 1
        %s189 = smul.addr %s188, 48
        %s190 = scalar_lea.vmem [#allocation3], %s189
        %p191 = pneg %p43
        %p192 = pneg %p40
        %p193 = pneg %p64
        %p194 = pneg %p61
        %p195 = pneg %p85
        %p196 = pneg %p82
        %p197 = pneg %p111
        %p198 = pneg %p108
        %s199 = sand.u32 %s98, 1
        %s200 = scalar_lea.sflag [#allocation5], %s199
        %s201 = sand.u32 %s98, 1
        %s202 = smul.addr %s201, 48
        %s203 = scalar_lea.vmem [#allocation8], %s202
        %s204 = smul.u32 2, %s22
        %s205 = smul.u32 2, %s22
        %v206 = vld [vmem:[%s177] sm:$0xff]
        %v207 = vld [vmem:[%s177 + $0x8] sm:$0xff]
        %v208 = vld [vmem:[%s177 + $0x10] sm:$0xff]
        %v209 = vld [vmem:[%s177 + $0x18] sm:$0xff]
        %v210 = vld [vmem:[%s177 + $0x20] sm:$0xff]
        %v211 = vld [vmem:[%s177 + $0x28] sm:$0xff]
        %v212 = vcvt.s32.f32 %v206
        %v213 = vcvt.s32.f32 %v207
        %v214 = vcvt.s32.f32 %v208
        %v215 = vcvt.s32.f32 %v209
        %v216 = vcvt.s32.f32 %v210
        %v217 = vcvt.s32.f32 %v211
        %s218 = sld [smem:[#allocation2]]
        %s219 = scalar_lea.vmem [#allocation6], 2
        %v220 = vld [vmem:[%s219] ss:$8 sm:$0x7]
        %v222 = vlaneseq
        %v223 = vshrl.u32 %v222, 7
        %v224 = vsub.s32 0, %v223
        %v225 = vrot.slane %v220, %v224
        %v226 = vlaneseq
        %v227 = vshrl.u32 %v226, 7
        %v228 = vsub.s32 1, %v227
        %v229 = vrot.slane %v220, %v228
        %v230 = vlaneseq
        %v231 = vshrl.u32 %v230, 7
        %v232 = vsub.s32 2, %v231
        %v233 = vrot.slane %v220, %v232
        %v237 = vmul.f32 %v212, %v225
        %v238 = vmul.f32 %v213, %v229
        %v239 = vmul.f32 %v214, %v233
        %v240 = vmul.f32 %v215, %v225
        %v241 = vmul.f32 %v216, %v229
        %v242 = vmul.f32 %v217, %v233
        %243 = vrot.lane.b32.xlu0 %v212, 1
        %v244 = vpop.permute.xlu0 %243
        %245 = vrot.lane.b32.xlu0 %v215, 1
        %v246 = vpop.permute.xlu0 %245
        %247 = vrot.lane.b32.xlu0 %v213, 1
        %v248 = vpop.permute.xlu0 %247
        %249 = vrot.lane.b32.xlu0 %v216, 1
        %v250 = vpop.permute.xlu0 %249
        %251 = vrot.lane.b32.xlu0 %v214, 1
        %v252 = vpop.permute.xlu0 %251
        %253 = vrot.lane.b32.xlu0 %v217, 1
        %v254 = vpop.permute.xlu0 %253
        %v255 = vlaneseq
        %v256 = vand.u32 %v255, 127
        %vm257 = vcmp.lt.s32.totalorder %v256, 1
        %v258 = vsel %vm257, %v248, %v252
        %v259 = vsel %vm257, %v250, %v254
        %v260 = vsel %vm257, %v244, %v248
        %v261 = vsel %vm257, %v246, %v250
        %v262 = vsel %vm257, %v252, %v244
        %v263 = vsel %vm257, %v254, %v246
        %s264 = scalar_lea.vmem [#allocation6], 1
        %v265 = vld [vmem:[%s264] ss:$8 sm:$0x7]
        %v267 = vlaneseq
        %v268 = vshrl.u32 %v267, 7
        %v269 = vsub.s32 0, %v268
        %v270 = vrot.slane %v265, %v269
        %v271 = vlaneseq
        %v272 = vshrl.u32 %v271, 7
        %v273 = vsub.s32 1, %v272
        %v274 = vrot.slane %v265, %v273
        %v275 = vlaneseq
        %v276 = vshrl.u32 %v275, 7
        %v277 = vsub.s32 2, %v276
        %v278 = vrot.slane %v265, %v277
        %v282 = vmul.f32 %v262, %v270
        %v283 = vmul.f32 %v260, %v274
        %v284 = vmul.f32 %v258, %v278
        %v285 = vmul.f32 %v263, %v270
        %v286 = vmul.f32 %v261, %v274
        %v287 = vmul.f32 %v259, %v278
        %v288 = vadd.f32 %v237, %v282
        %v289 = vadd.f32 %v238, %v283
        %v290 = vadd.f32 %v239, %v284
        %v291 = vadd.f32 %v240, %v285
        %v292 = vadd.f32 %v241, %v286
        %v293 = vadd.f32 %v242, %v287
        %294 = vrot.lane.b32.xlu0 %v212, 2
        %v295 = vpop.permute.xlu0 %294
        %296 = vrot.lane.b32.xlu0 %v215, 2
        %v297 = vpop.permute.xlu0 %296
        %298 = vrot.lane.b32.xlu0 %v213, 2
        %v299 = vpop.permute.xlu0 %298
        %300 = vrot.lane.b32.xlu0 %v216, 2
        %v301 = vpop.permute.xlu0 %300
        %302 = vrot.lane.b32.xlu0 %v214, 2
        %v303 = vpop.permute.xlu0 %302
        %304 = vrot.lane.b32.xlu0 %v217, 2
        %v305 = vpop.permute.xlu0 %304
        %vm306 = vcmp.lt.s32.totalorder %v256, 2
        %v307 = vsel %vm306, %v299, %v303
        %v308 = vsel %vm306, %v301, %v305
        %v309 = vsel %vm306, %v295, %v299
        %v310 = vsel %vm306, %v297, %v301
        %v311 = vsel %vm306, %v303, %v295
        %v312 = vsel %vm306, %v305, %v297
        %v313 = vld [vmem:[#allocation6] ss:$8 sm:$0x7]
        %v315 = vlaneseq
        %v316 = vshrl.u32 %v315, 7
        %v317 = vsub.s32 0, %v316
        %v318 = vrot.slane %v313, %v317
        %v319 = vlaneseq
        %v320 = vshrl.u32 %v319, 7
        %v321 = vsub.s32 1, %v320
        %v322 = vrot.slane %v313, %v321
        %v323 = vlaneseq
        %v324 = vshrl.u32 %v323, 7
        %v325 = vsub.s32 2, %v324
        %v326 = vrot.slane %v313, %v325
        %v330 = vmul.f32 %v311, %v318
        %v331 = vmul.f32 %v309, %v322
        %v332 = vmul.f32 %v307, %v326
        %v333 = vmul.f32 %v312, %v318
        %v334 = vmul.f32 %v310, %v322
        %v335 = vmul.f32 %v308, %v326
        %v336 = vadd.f32 %v288, %v330
        %v337 = vadd.f32 %v289, %v331
        %v338 = vadd.f32 %v290, %v332
        %v339 = vadd.f32 %v291, %v333
        %v340 = vadd.f32 %v292, %v334
        %v341 = vadd.f32 %v293, %v335
        %342 = vrot.lane.b32.xlu0 %v212, 127
        %v343 = vpop.permute.xlu0 %342
        %344 = vrot.lane.b32.xlu0 %v215, 127
        %v345 = vpop.permute.xlu0 %344
        %346 = vrot.lane.b32.xlu0 %v213, 127
        %v347 = vpop.permute.xlu0 %346
        %348 = vrot.lane.b32.xlu0 %v216, 127
        %v349 = vpop.permute.xlu0 %348
        %350 = vrot.lane.b32.xlu0 %v214, 127
        %v351 = vpop.permute.xlu0 %350
        %352 = vrot.lane.b32.xlu0 %v217, 127
        %v353 = vpop.permute.xlu0 %352
        %vm354 = vcmp.lt.s32.totalorder %v256, 127
        %v355 = vsel %vm354, %v347, %v351
        %v356 = vsel %vm354, %v349, %v353
        %v357 = vsel %vm354, %v343, %v347
        %v358 = vsel %vm354, %v345, %v349
        %v359 = vsel %vm354, %v351, %v343
        %v360 = vsel %vm354, %v353, %v345
        %s361 = scalar_lea.vmem [#allocation6], 3
        %v362 = vld [vmem:[%s361] ss:$8 sm:$0x7]
        %v364 = vlaneseq
        %v365 = vshrl.u32 %v364, 7
        %v366 = vsub.s32 0, %v365
        %v367 = vrot.slane %v362, %v366
        %v368 = vlaneseq
        %v369 = vshrl.u32 %v368, 7
        %v370 = vsub.s32 1, %v369
        %v371 = vrot.slane %v362, %v370
        %v372 = vlaneseq
        %v373 = vshrl.u32 %v372, 7
        %v374 = vsub.s32 2, %v373
        %v375 = vrot.slane %v362, %v374
        %v379 = vmul.f32 %v357, %v367
        %v380 = vmul.f32 %v355, %v371
        %v381 = vmul.f32 %v359, %v375
        %v382 = vmul.f32 %v358, %v367
        %v383 = vmul.f32 %v356, %v371
        %v384 = vmul.f32 %v360, %v375
        %v385 = vadd.f32 %v336, %v379
        %v386 = vadd.f32 %v337, %v380
        %v387 = vadd.f32 %v338, %v381
        %v388 = vadd.f32 %v339, %v382
        %v389 = vadd.f32 %v340, %v383
        %v390 = vadd.f32 %v341, %v384
        %391 = vrot.lane.b32.xlu0 %v212, 126
        %v392 = vpop.permute.xlu0 %391
        %393 = vrot.lane.b32.xlu0 %v215, 126
        %v394 = vpop.permute.xlu0 %393
        %395 = vrot.lane.b32.xlu0 %v213, 126
        %v396 = vpop.permute.xlu0 %395
        %397 = vrot.lane.b32.xlu0 %v216, 126
        %v398 = vpop.permute.xlu0 %397
        %399 = vrot.lane.b32.xlu0 %v214, 126
        %v400 = vpop.permute.xlu0 %399
        %401 = vrot.lane.b32.xlu0 %v217, 126
        %v402 = vpop.permute.xlu0 %401
        %vm403 = vcmp.lt.s32.totalorder %v256, 126
        %v404 = vsel %vm403, %v396, %v400
        %v405 = vsel %vm403, %v398, %v402
        %v406 = vsel %vm403, %v392, %v396
        %v407 = vsel %vm403, %v394, %v398
        %v408 = vsel %vm403, %v400, %v392
        %v409 = vsel %vm403, %v402, %v394
        %s410 = scalar_lea.vmem [#allocation6], 4
        %v411 = vld [vmem:[%s410] ss:$8 sm:$0x7]
        %v413 = vlaneseq
        %v414 = vshrl.u32 %v413, 7
        %v415 = vsub.s32 0, %v414
        %v416 = vrot.slane %v411, %v415
        %v417 = vlaneseq
        %v418 = vshrl.u32 %v417, 7
        %v419 = vsub.s32 1, %v418
        %v420 = vrot.slane %v411, %v419
        %v421 = vlaneseq
        %v422 = vshrl.u32 %v421, 7
        %v423 = vsub.s32 2, %v422
        %v424 = vrot.slane %v411, %v423
        %v428 = vmul.f32 %v406, %v416
        %v429 = vmul.f32 %v404, %v420
        %v430 = vmul.f32 %v408, %v424
        %v431 = vmul.f32 %v407, %v416
        %v432 = vmul.f32 %v405, %v420
        %v433 = vmul.f32 %v409, %v424
        %v434 = vadd.f32 %v385, %v428
        %v435 = vadd.f32 %v386, %v429
        %v436 = vadd.f32 %v387, %v430
        %v437 = vadd.f32 %v388, %v431
        %v438 = vadd.f32 %v389, %v432
        %v439 = vadd.f32 %v390, %v433
        %v440 = vstv %s218
        %v441 = vrcp.pop %v440
        %v442 = vmul.f32 %v434, %v441
        %v443 = vmul.f32 %v435, %v441
        %v444 = vmul.f32 %v436, %v441
        %v445 = vmul.f32 %v437, %v441
        %v446 = vmul.f32 %v438, %v441
        %v447 = vmul.f32 %v439, %v441
        %v448 = vfloor.f32 %v442
        %v449 = vfloor.f32 %v443
        %v450 = vfloor.f32 %v444
        %v451 = vfloor.f32 %v445
        %v452 = vfloor.f32 %v446
        %v453 = vfloor.f32 %v447
        %v454 = vcvt.f32.s32.to.zero.pseudo %v448
        %v455 = vcvt.f32.s32.to.zero.pseudo %v449
        %v456 = vcvt.f32.s32.to.zero.pseudo %v450
        %v457 = vcvt.f32.s32.to.zero.pseudo %v451
        %v458 = vcvt.f32.s32.to.zero.pseudo %v452
        %v459 = vcvt.f32.s32.to.zero.pseudo %v453
        %460 = vst [vmem:[%s203] sm:$0xff] %v454
        %461 = vst [vmem:[%s203 + $0x8] sm:$0xff] %v455
        %462 = vst [vmem:[%s203 + $0x10] sm:$0xff] %v456
        %463 = vst [vmem:[%s203 + $0x18] sm:$0xff] %v457
        %464 = vst [vmem:[%s203 + $0x20] sm:$0xff] %v458
        %465 = vst [vmem:[%s203 + $0x28] sm:$0xff] %v459
        %s466 = sand.u32 %s98, 1
        %s467 = scalar_lea.sflag [#allocation5], %s466
        %s468 = sand.u32 %s98, 1
        %s469 = smul.addr %s468, 48
        %s470 = scalar_lea.vmem [#allocation8], %s469
        // Predicated region
        $region41: #{tpu_custom_call.1} parent=31 // pred_check
          %p471 = pneg %p108
        $region42: #{tpu_custom_call.1} parent=31 // pred_check_branch
          %473 = sbr.rel (%p471) target = $region44
        $region43: #{tpu_custom_call.1} parent=31 // pred_region
          %s474 = smul.u32 2, %s22
          %s476 = ssub.s32 768, 768
          %477 = vsyncadd %s467, %s476
          %s478 = smul.addr %s474, 3
          %s479 = smul.addr %s478, 128
          %s480 = scalar_lea.hbm %s3, %s479
          %s481 = sshll.u32 %s470, 4
          %s482 = int_to_ptr.vmem [resolvable:$true] %s481
          %487 = dma.vmem_to_hbm [thread:$0]  %s482, 768, %s480, %s467, 384, 384, 24
        $region44: #{tpu_custom_call.1} parent=31 // pred_fallthru
          _
      $region32: #{tpu_custom_call.1} parent=5 // pred_fallthru
        _
      %p488 = scmp.le.s32.totalorder 2, %s17
      // Predicated region
      $region45: #{tpu_custom_call.1} parent=5 // pred_check
        %p489 = pneg %p488
      $region46: #{tpu_custom_call.1} parent=5 // pred_check_branch
        %491 = sbr.rel (%p489) target = $region48
      $region47: #{tpu_custom_call.1} parent=5 // pred_region
        %s492 = ssub.s32 %s17, 2
        // Predicated region
        $region49: #{tpu_custom_call.1} parent=47 // pred_check
          %p493 = pneg %p114
        $region50: #{tpu_custom_call.1} parent=47 // pred_check_branch
          %495 = sbr.rel (%p493) target = $region52
        $region51: #{tpu_custom_call.1} parent=47 // pred_region
          %s496 = sand.u32 %s99, 1
          %s497 = scalar_lea.sflag [#allocation5], %s496
          %s498 = sand.u32 %s99, 1
          %s499 = smul.addr %s498, 48
          %s500 = scalar_lea.vmem [#allocation8], %s499
          %501 = dma.done %s497, 768
        $region52: #{tpu_custom_call.1} parent=47 // pred_fallthru
          _
      $region48: #{tpu_custom_call.1} parent=5 // pred_fallthru
        _
    $region6: #{tpu_custom_call.1} parent=1 // loop_footer
      %s21 = sadd.s32 1, %s17
    $region7: #{tpu_custom_call.1} parent=1 // loop_footer_branch
      %16 = sbr.rel target = $region3
    $region8: #{tpu_custom_call.1} parent=1 // loop_exit
      _
    %502 = vsyncpa [#allocation4], 1
    %s503 = scalar_lea.sflag [#allocation4], 1
    %504 = vsyncpa %s503, 1
    %505 = vsyncpa [#allocation7], 1
    %506 = vsyncpa [#allocation5], 1
    %s507 = scalar_lea.sflag [#allocation5], 1
    %508 = vsyncpa %s507, 1

</llo_original>
